<compile_context>
chip_gen: v5e
topology: v5e:2x2
jax: 0.10.0
libtpu: 0.0.40
codegen_flags: <defaults>
</compile_context>

<pallas_src>
import jax
import jax.numpy as jnp
from jax import lax
from jax.experimental import pallas as pl
from jax.experimental.pallas import tpu as pltpu


# ----------------------------------------------------------------------------
# Pallas kernel: token classifier, lane-dense output.
#   x_ref: (1, TL, H)  bf16 activation tile (one batch element, one L tile)
#   w_ref: (N, H)      bf16 classifier weight, native nn.Linear layout
#   b_ref: (N, 1)      f32  classifier bias
#   o_ref: (1, N, TL)  f32  logits tile, L on lanes (unmasked full-lane stores)
# ----------------------------------------------------------------------------
def classifier_kernel(x_ref, w_ref, b_ref, o_ref):
    x = x_ref[0]                      # (TL, H) bf16
    w = w_ref[...]                    # (N, H)  bf16
    # Contract on H of both operands -> (N, TL); MXU with f32 accumulation.
    acc = lax.dot_general(
        w, x,
        dimension_numbers=(((1,), (1,)), ((), ())),
        preferred_element_type=jnp.float32,
    )                                 # (N, TL) f32
    o_ref[0] = acc + b_ref[...]       # bias broadcast over lanes, f32 epilogue


def _choose_l_tile(L, max_tl=512):
    """Largest convenient L tile: keeps double-buffered bf16 input blocks to a
    few MiB even at H=1024, well inside v7x's 64 MiB VMEM / 32 MiB default."""
    if L <= max_tl:
        return L
    for tl in (max_tl, 384, 256, 128):
        if L % tl == 0:
            return tl
    return L


def classifier_pallas(hidden, weight, bias, *, tl=None):
    """hidden: [B, L, H] f32; weight: [N, H] f32 (native Linear layout);
    bias: [N] f32.  Returns lane-dense logits [B, N, L] f32."""
    B, L, H = hidden.shape
    N = weight.shape[0]
    if tl is None:
        tl = _choose_l_tile(L)
    assert L % tl == 0, (L, tl)

    x = hidden.astype(jnp.bfloat16)          # halve HBM traffic (mem-bound)
    w = weight.astype(jnp.bfloat16)
    b2 = bias.astype(jnp.float32).reshape(N, 1)

    return pl.pallas_call(
        classifier_kernel,
        out_shape=jax.ShapeDtypeStruct((B, N, L), jnp.float32),
        grid_spec=pltpu.PrefetchScalarGridSpec(
            num_scalar_prefetch=0,
            grid=(B, L // tl),
            in_specs=[
                pl.BlockSpec((1, tl, H), lambda b, t: (b, t, 0)),
                pl.BlockSpec((N, H), lambda b, t: (0, 0)),
                pl.BlockSpec((N, 1), lambda b, t: (0, 0)),
            ],
            out_specs=pl.BlockSpec((1, N, tl), lambda b, t: (b, 0, t)),
        ),
        compiler_params=pltpu.CompilerParams(
            dimension_semantics=("parallel", "parallel")),
    )(x, w, b2)


# ----------------------------------------------------------------------------
# Synthetic encoder producing last hidden_states [B, L, H].
# TODO(synk): the real `self.model` (Nucleotide Transformer encoder) and its
#             attention_mask=(input_ids > 1) handling are external; replaced by
#             a deterministic embedding + sinusoidal positional mix.
# ----------------------------------------------------------------------------
def synthetic_encoder_hidden_states(input_ids, emb_table):
    reps = emb_table[input_ids]                                   # [B, L, H]
    L = input_ids.shape[-1]
    H = emb_table.shape[-1]
    pos = jnp.arange(L, dtype=jnp.float32)[:, None]               # [L, 1]
    dim = jnp.arange(H, dtype=jnp.float32)[None, :]               # [1, H]
    pos_enc = jnp.sin(pos / (10.0 ** (dim / H)))                  # [L, H]
    return reps + pos_enc[None, :, :]


# ----------------------------------------------------------------------------
# Full wrapper reproducing NTForTokenCls.forward
# ----------------------------------------------------------------------------
def nt_for_token_cls_forward(input_ids, emb_table, cls_weight, cls_bias,
                             num_labels=3, pad=512, tl=None):
    # input_ids = input_ids[:, 1:]
    ids = input_ids[:, 1:]                                        # [B, L]
    # hidden_states[-1] from the (synthetic) encoder
    hidden = synthetic_encoder_hidden_states(ids, emb_table)      # [B, L, H]

    # classifier -> lane-dense [B, N, L]  (N = 6 * num_labels)
    logits_nl = classifier_pallas(hidden, cls_weight, cls_bias, tl=tl)
    B, N, L = logits_nl.shape
    k = N // num_labels                                           # = 6

    # Equivalent of: logits.reshape(B, -1, num_labels)[:, pad:-pad, :].transpose(1, 2)
    # logits_nl[b, 3*kk + c, l] == logits_full[b, l, 3*kk + c]
    r = logits_nl.reshape(B, k, num_labels, L)                    # [B, 6, 3, L]
    s = jnp.transpose(r, (0, 2, 3, 1)).reshape(B, num_labels, k * L)  # [B, 3, 6L]
    return s[:, :, pad:-pad]                                      # [B, 3, 6L-2*pad]


if __name__ == "__main__":
    # Small, deterministic shapes consistent with the module
    # (real: hidden=1024, num_labels=3 -> N=18, 6L=9000, pad=4250).
    B, L0 = 2, 257              # input_ids length; L = L0 - 1 = 256 after drop
    H = 32                      # hidden size (scaled down from 1024)
    NUM_LABELS = 3
    N = 6 * NUM_LABELS          # classifier output dim = 18
    VOCAB = 16
    L = L0 - 1
    PAD = (6 * L - 512) // 2    # scaled analogue of (9000 - 500) // 2
    TL = 128                    # exercise L tiling: grid = (B, L // TL) = (2, 2)

    key = jax.random.PRNGKey(0)
    k_ids, k_emb, k_w, k_b = jax.random.split(key, 4)

    input_ids = jax.random.randint(k_ids, (B, L0), 0, VOCAB, dtype=jnp.int32)
    emb_table = jax.random.normal(k_emb, (VOCAB, H), dtype=jnp.float32) * 0.1
    # nn.Linear(H, N): weight [N, H], bias [N]  (native layout, NOT transposed)
    cls_weight = jax.random.normal(k_w, (N, H), dtype=jnp.float32) * 0.05
    cls_bias = jax.random.normal(k_b, (N,), dtype=jnp.float32) * 0.01

    out = nt_for_token_cls_forward(input_ids, emb_table, cls_weight, cls_bias,
                                   num_labels=NUM_LABELS, pad=PAD, tl=TL)
    out = jax.block_until_ready(out)

    # Pure-JAX reference of the same forward (same bf16 input rounding).
    ids = input_ids[:, 1:]
    hidden = synthetic_encoder_hidden_states(ids, emb_table)
    h_bf = hidden.astype(jnp.bfloat16).astype(jnp.float32)
    w_bf = cls_weight.astype(jnp.bfloat16).astype(jnp.float32)
    logits_full = h_bf @ w_bf.T + cls_bias                        # [B, L, N]
    logits_ref = logits_full.reshape(B, -1, NUM_LABELS)           # [B, 6L, 3]
    logits_ref = jnp.transpose(logits_ref[:, PAD:-PAD, :], (0, 2, 1))

    assert out.shape == (B, NUM_LABELS, 6 * L - 2 * PAD), out.shape
    assert jnp.allclose(out, logits_ref, atol=1e-4, rtol=1e-4), (
        float(jnp.max(jnp.abs(out - logits_ref))))

    print("KERNEL_OK")
</pallas_src>

<mosaic_0001>
module attributes {stable_mosaic.version = 11 : i64} {
  func.func @classifier_kernel(%arg0: i32, %arg1: i32, %arg2: memref<1x128x32xbf16, #tpu.memory_space<vmem>>, %arg3: memref<18x32xbf16, #tpu.memory_space<vmem>>, %arg4: memref<18x1xf32, #tpu.memory_space<vmem>>, %arg5: memref<1x18x128xf32, #tpu.memory_space<vmem>>) attributes {dimension_semantics = [#tpu.dimension_semantics<parallel>, #tpu.dimension_semantics<parallel>], iteration_bounds = array<i64: 2, 2>, scalar_prefetch = 0 : i64, scratch_operands = 0 : i64, tpu.core_type = #tpu.core_type<tc>, window_params = [{transform_indices = @transform_0, window_bounds = array<i64: 1, 128, 32>}, {pipeline_mode = #tpu.pipeline_mode<synchronous>, transform_indices = @transform_1, window_bounds = array<i64: 18, 32>}, {pipeline_mode = #tpu.pipeline_mode<synchronous>, transform_indices = @transform_2, window_bounds = array<i64: 18, 1>}, {transform_indices = @transform_3, window_bounds = array<i64: 1, 18, 128>}]} {
    %c0 = arith.constant 0 : index
    %c0_0 = arith.constant 0 : index
    %c0_1 = arith.constant 0 : index
    %0 = vector.load %arg2[%c0, %c0_0, %c0_1] : memref<1x128x32xbf16, #tpu.memory_space<vmem>>, vector<1x128x32xbf16>
    %1 = vector.shape_cast %0 : vector<1x128x32xbf16> to vector<128x32xbf16>
    %c0_2 = arith.constant 0 : index
    %c0_3 = arith.constant 0 : index
    %2 = vector.load %arg3[%c0_2, %c0_3] : memref<18x32xbf16, #tpu.memory_space<vmem>>, vector<18x32xbf16>
    %cst = arith.constant dense<0.000000e+00> : vector<18x128xf32>
    %3 = tpu.matmul %2, %1, %cst {dimension_numbers = #tpu.dot_dimension_numbers<[1], [1], [0], [0], [0, 0, 1, 0], [], []>} : vector<18x32xbf16>, vector<128x32xbf16>, vector<18x128xf32> -> vector<18x128xf32>
    %c0_4 = arith.constant 0 : index
    %c0_5 = arith.constant 0 : index
    %4 = vector.load %arg4[%c0_4, %c0_5] : memref<18x1xf32, #tpu.memory_space<vmem>>, vector<18x1xf32>
    %5 = vector.broadcast %4 : vector<18x1xf32> to vector<18x128xf32>
    %6 = arith.addf %3, %5 : vector<18x128xf32>
    %c0_6 = arith.constant 0 : index
    %c0_7 = arith.constant 0 : index
    %c0_8 = arith.constant 0 : index
    %7 = vector.load %arg5[%c0_6, %c0_7, %c0_8] : memref<1x18x128xf32, #tpu.memory_space<vmem>>, vector<1x18x128xf32>
    %8 = vector.shape_cast %7 : vector<1x18x128xf32> to vector<18x128xf32>
    %9 = vector.shape_cast %6 : vector<18x128xf32> to vector<1x18x128xf32>
    tpu.vector_store %arg5[%c0_6, %c0_7, %c0_8], %9 {strides = array<i32>} : memref<1x18x128xf32, #tpu.memory_space<vmem>>, vector<1x18x128xf32>,
    return
  }
  func.func @transform_0(%arg0: i32, %arg1: i32) -> (i32, i32, i32) {
    %c0_i32 = arith.constant 0 : i32
    %c0_i32_0 = arith.constant 0 : i32
    return %arg0, %arg1, %c0_i32 : i32, i32, i32
  }
  func.func @transform_1(%arg0: i32, %arg1: i32) -> (i32, i32) {
    %c0_i32 = arith.constant 0 : i32
    %c0_i32_0 = arith.constant 0 : i32
    %c0_i32_1 = arith.constant 0 : i32
    return %c0_i32, %c0_i32_0 : i32, i32
  }
  func.func @transform_2(%arg0: i32, %arg1: i32) -> (i32, i32) {
    %c0_i32 = arith.constant 0 : i32
    %c0_i32_0 = arith.constant 0 : i32
    %c0_i32_1 = arith.constant 0 : i32
    return %c0_i32, %c0_i32_0 : i32, i32
  }
  func.func @transform_3(%arg0: i32, %arg1: i32) -> (i32, i32, i32) {
    %c0_i32 = arith.constant 0 : i32
    %c0_i32_0 = arith.constant 0 : i32
    return %arg0, %c0_i32, %arg1 : i32, i32, i32
  }
}

</mosaic_0001>

<llo_original>
// kernel: tpu_custom_call.1
$region0: #{tpu_custom_call.1}
  #allocation0 [shape = 'u32[]', space=smem, size = 0x4, offset = 0x4, fixed_abs, tag = 'smem constant byte address 0x4 - core index']
  #allocation1 [shape = 'u32[72,128]{1,0:T(1,128)}', space=vmem, size = 0x9000, scoped, tag = 'internal scratch']
  %s0 = inlined_call_operand.vmem [shape: bf16[2,256,32], index: 0, kind: input, shape index: {}]
  %s1 = inlined_call_operand.vmem [shape: bf16[18,32], index: 1, kind: input, shape index: {}]
  %s2 = inlined_call_operand.vmem [shape: f32[18,1], index: 2, kind: input, shape index: {}]
  %s3 = inlined_call_operand.vmem [shape: f32[2,18,256], index: 3, kind: output, shape index: {}]
  %s4 = sld [smem:[#allocation0]]
  $region79: #{tpu_custom_call.1} parent=0
    _
  %s6 = ssub.s32 1, %s4
  %s7 = scalar_select 0, %s6, %s4
  $region1: #{tpu_custom_call.1} parent=0
    #allocation2 [shape = 'u8[24576]{0}', space=vmem, size = 0x6000, scoped, tag = 'output window, operand 0']
    loop: start=0, step=1, limit=6
    $region2: #{tpu_custom_call.1} parent=1 // loop_pre_header
      _
    $region3: #{tpu_custom_call.1} parent=1 // loop_header
      %s9 = sphi 0, %s13
      %p10 = scmp.ge.s32.totalorder %s9, 6
      %s16 = sphi 0, %s28
      %s17 = sphi 0, %s24
      %s18 = sphi 0, %s16
      %s19 = sphi 0, %s17
      %s20 = sphi 0, %s18
      %s21 = sphi 0, %s19
      %s33 = sphi 0, %s35
      %s36 = sphi 0, %s33
      %s37 = sphi 0, %s36
      %s53 = sphi 0, %s37
      %s57 = sphi 0, %s57
      %s59 = sphi 0, %s57
      %s60 = sphi 0, %s59
      %s74 = sphi 0, %s60
      %s78 = sphi 0, %s78
      %s80 = sphi 0, %s78
      %s81 = sphi 0, %s80
      %s95 = sphi 0, %s81
      %s103 = sphi 0, %s105
      %s106 = sphi 0, %s103
      %s107 = sphi 0, %s106
      %s123 = sphi 0, %s107
    $region4: #{tpu_custom_call.1} parent=1 // loop_header_branch
      %12 = sbr.rel (%p10) target = $region8
    $region5: #{tpu_custom_call.1} parent=1 // loop_body
      %s14 = ssub.s32 %s9, 1
      %s15 = ssub.s32 %s9, 2
      %s22 = sadd.s32 1, %s17
      %p23 = scmp.ge.s32.totalorder %s22, 2
      %s24 = scalar_select %p23, 0, %s22
      %s25 = sadd.s32 1, %s16
      %s26 = scalar_select %p23, %s25, %s16
      %p27 = scmp.ge.s32.totalorder %s26, 2
      %s28 = scalar_select %p27, 0, %s26
      %s29 = ssub.s32 %s16, %s28
      %s30 = ssub.s32 %s17, %s24
      %s31 = sor.u32 %s29, %s30
      %p32 = scmp.eq.s32.totalorder %s31, 0
      %s34 = sadd.s32 %s33, 1
      %s35 = scalar_select %p32, %s33, %s34
      %p38 = pneg %p32
      %p39 = scmp.eq.s32.totalorder %s9, 3
      %p40 = por %p38, %p39
      %p41 = scmp.ne.s32.totalorder %s33, %s36
      %p42 = scmp.eq.s32.totalorder %s9, 0
      %p43 = por %p41, %p42
      %p44 = scmp.ne.s32.totalorder %s33, %s36
      %p45 = scmp.eq.s32.totalorder %s14, 3
      %p46 = por %p44, %p45
      %p47 = scmp.ne.s32.totalorder %s36, %s37
      %p48 = scmp.eq.s32.totalorder %s14, 0
      %p49 = por %p47, %p48
      %p50 = scmp.ne.s32.totalorder %s36, %s37
      %p51 = scmp.eq.s32.totalorder %s15, 3
      %p52 = por %p50, %p51
      %p54 = scmp.ne.s32.totalorder %s37, %s53
      %p55 = scmp.eq.s32.totalorder %s15, 0
      %p56 = por %p54, %p55
      %s58 = sadd.s32 %s57, 1
      %p61 = scmp.eq.s32.totalorder %s9, 3
      %p62 = scmp.ne.s32.totalorder %s57, %s59
      %p63 = scmp.eq.s32.totalorder %s9, 0
      %p64 = por %p62, %p63
      %p65 = scmp.ne.s32.totalorder %s57, %s59
      %p66 = scmp.eq.s32.totalorder %s14, 3
      %p67 = por %p65, %p66
      %p68 = scmp.ne.s32.totalorder %s59, %s60
      %p69 = scmp.eq.s32.totalorder %s14, 0
      %p70 = por %p68, %p69
      %p71 = scmp.ne.s32.totalorder %s59, %s60
      %p72 = scmp.eq.s32.totalorder %s15, 3
      %p73 = por %p71, %p72
      %p75 = scmp.ne.s32.totalorder %s60, %s74
      %p76 = scmp.eq.s32.totalorder %s15, 0
      %p77 = por %p75, %p76
      %s79 = sadd.s32 %s78, 1
      %p82 = scmp.eq.s32.totalorder %s9, 3
      %p83 = scmp.ne.s32.totalorder %s78, %s80
      %p84 = scmp.eq.s32.totalorder %s9, 0
      %p85 = por %p83, %p84
      %p86 = scmp.ne.s32.totalorder %s78, %s80
      %p87 = scmp.eq.s32.totalorder %s14, 3
      %p88 = por %p86, %p87
      %p89 = scmp.ne.s32.totalorder %s80, %s81
      %p90 = scmp.eq.s32.totalorder %s14, 0
      %p91 = por %p89, %p90
      %p92 = scmp.ne.s32.totalorder %s80, %s81
      %p93 = scmp.eq.s32.totalorder %s15, 3
      %p94 = por %p92, %p93
      %p96 = scmp.ne.s32.totalorder %s81, %s95
      %p97 = scmp.eq.s32.totalorder %s15, 0
      %p98 = por %p96, %p97
      %s99 = ssub.s32 %s16, %s28
      %s100 = ssub.s32 %s17, %s24
      %s101 = sor.u32 %s99, %s100
      %p102 = scmp.eq.s32.totalorder %s101, 0
      %s104 = sadd.s32 %s103, 1
      %s105 = scalar_select %p102, %s103, %s104
      %p108 = pneg %p102
      %p109 = scmp.eq.s32.totalorder %s9, 3
      %p110 = por %p108, %p109
      %p111 = scmp.ne.s32.totalorder %s103, %s106
      %p112 = scmp.eq.s32.totalorder %s9, 0
      %p113 = por %p111, %p112
      %p114 = scmp.ne.s32.totalorder %s103, %s106
      %p115 = scmp.eq.s32.totalorder %s14, 3
      %p116 = por %p114, %p115
      %p117 = scmp.ne.s32.totalorder %s106, %s107
      %p118 = scmp.eq.s32.totalorder %s14, 0
      %p119 = por %p117, %p118
      %p120 = scmp.ne.s32.totalorder %s106, %s107
      %p121 = scmp.eq.s32.totalorder %s15, 3
      %p122 = por %p120, %p121
      %p124 = scmp.ne.s32.totalorder %s107, %s123
      %p125 = scmp.eq.s32.totalorder %s15, 0
      %p126 = por %p124, %p125
      %p127 = scmp.le.s32.totalorder 1, %s9
      %p128 = scmp.lt.s32.totalorder %s9, 5
      %p129 = pnand %p127, %p128
      %p130 = pneg %p129
      // Predicated region
      $region9: #{tpu_custom_call.1} parent=5 // pred_check
        _
      $region10: #{tpu_custom_call.1} parent=5 // pred_check_branch
        %132 = sbr.rel (%p129) target = $region12
      $region11: #{tpu_custom_call.1} parent=5 // pred_region
        %s133 = ssub.s32 %s9, 1
        // Predicated region
        $region13: #{tpu_custom_call.1} parent=11 // pred_check
          %p134 = pneg %p70
        $region14: #{tpu_custom_call.1} parent=11 // pred_check_branch
          %136 = sbr.rel (%p134) target = $region16
        $region15: #{tpu_custom_call.1} parent=11 // pred_region
          _
        $region16: #{tpu_custom_call.1} parent=11 // pred_fallthru
          _
        // Predicated region
        $region17: #{tpu_custom_call.1} parent=11 // pred_check
          %p137 = pneg %p91
        $region18: #{tpu_custom_call.1} parent=11 // pred_check_branch
          %139 = sbr.rel (%p137) target = $region20
        $region19: #{tpu_custom_call.1} parent=11 // pred_region
          _
        $region20: #{tpu_custom_call.1} parent=11 // pred_fallthru
          _
      $region12: #{tpu_custom_call.1} parent=5 // pred_fallthru
        _
      %p140 = scmp.lt.s32.totalorder %s9, 4
      // Predicated region
      $region21: #{tpu_custom_call.1} parent=5 // pred_check
        %p141 = pneg %p140
      $region22: #{tpu_custom_call.1} parent=5 // pred_check_branch
        %143 = sbr.rel (%p141) target = $region24
      $region23: #{tpu_custom_call.1} parent=5 // pred_region
        // Predicated region
        $region25: #{tpu_custom_call.1} parent=23 // pred_check
          %p144 = pneg %p43
        $region26: #{tpu_custom_call.1} parent=23 // pred_check_branch
          %146 = sbr.rel (%p144) target = $region28
        $region27: #{tpu_custom_call.1} parent=23 // pred_region
          %s147 = smul.u32 16, %s17
          %p148 = scmp.lt.s32.totalorder %s16, 1
          %s149 = scalar_select %p148, %s16, 1
          %p150 = scmp.lt.s32.totalorder %s147, 31
          %s151 = scalar_select %p150, %s147, 31
          %s152 = smul.addr %s149, 32
          %s153 = sadd.s32 %s151, %s152
          %s154 = smul.addr %s153, 4
          %s155 = scalar_lea.vmem %s0, %s154
          %s156 = smul.u32 16, %s17
        $region28: #{tpu_custom_call.1} parent=23 // pred_fallthru
          _
      $region24: #{tpu_custom_call.1} parent=5 // pred_fallthru
        _
      %p157 = scmp.le.s32.totalorder 1, %s9
      %p158 = scmp.lt.s32.totalorder %s9, 5
      %p159 = pnand %p157, %p158
      %p160 = pneg %p159
      // Predicated region
      $region29: #{tpu_custom_call.1} parent=5 // pred_check
        _
      $region30: #{tpu_custom_call.1} parent=5 // pred_check_branch
        %162 = sbr.rel (%p159) target = $region32
      $region31: #{tpu_custom_call.1} parent=5 // pred_region
        %s163 = ssub.s32 %s9, 1
        %s164 = smul.u32 16, %s19
        %p165 = scmp.lt.s32.totalorder %s18, 1
        %s166 = scalar_select %p165, %s18, 1
        %p167 = scmp.lt.s32.totalorder %s164, 31
        %s168 = scalar_select %p167, %s164, 31
        %s169 = smul.addr %s166, 32
        %s170 = sadd.s32 %s168, %s169
        %s171 = smul.addr %s170, 4
        %s172 = scalar_lea.vmem %s0, %s171
        %p173 = pneg %p49
        %p174 = pneg %p46
        %p175 = pneg %p70
        %p176 = pneg %p67
        %p177 = pneg %p91
        %p178 = pneg %p88
        %p179 = pneg %p119
        %p180 = pneg %p116
        %s181 = sand.u32 %s106, 1
        %s182 = sand.u32 %s106, 1
        %s183 = smul.addr %s182, 24
        %s184 = scalar_lea.vmem [#allocation2], %s183
        %s185 = smul.u32 16, %s19
        %p186 = scmp.lt.s32.totalorder %s18, 1
        %s187 = scalar_select %p186, %s18, 1
        %p188 = scmp.lt.s32.totalorder %s185, 31
        %s189 = scalar_select %p188, %s185, 31
        %s190 = smul.addr %s187, 32
        %s191 = sadd.s32 %s189, %s190
        %s192 = smul.addr %s191, 4
        %s193 = scalar_lea.vmem %s0, %s192
        %s194 = smul.u32 16, %s19
        %v195 = vld [vmem:[%s193] sm:$0xf]
        %v196 = vld [vmem:[%s193 + $0x4] sm:$0xf]
        %v197 = vld [vmem:[%s193 + $0x8] sm:$0xf]
        %v198 = vld [vmem:[%s193 + $0xc] sm:$0xf]
        %v199 = vld [vmem:[%s193 + $0x10] sm:$0xf]
        %v200 = vld [vmem:[%s193 + $0x14] sm:$0xf]
        %v201 = vld [vmem:[%s193 + $0x18] sm:$0xf]
        %v202 = vld [vmem:[%s193 + $0x1c] sm:$0xf]
        %v203 = vld [vmem:[%s193 + $0x20] sm:$0xf]
        %v204 = vld [vmem:[%s193 + $0x24] sm:$0xf]
        %v205 = vld [vmem:[%s193 + $0x28] sm:$0xf]
        %v206 = vld [vmem:[%s193 + $0x2c] sm:$0xf]
        %v207 = vld [vmem:[%s193 + $0x30] sm:$0xf]
        %v208 = vld [vmem:[%s193 + $0x34] sm:$0xf]
        %v209 = vld [vmem:[%s193 + $0x38] sm:$0xf]
        %v210 = vld [vmem:[%s193 + $0x3c] sm:$0xf]
        %v211 = vld [vmem:[%s1] sm:$0xf]
        %v212 = vld [vmem:[%s1 + $0x4] sm:$0xf]
        %v213 = vld [vmem:[%s1 + $0x8] sm:$0x1]
        %v214 = vld [vmem:[%s2] sm:$0xff]
        %v215 = vld [vmem:[%s2 + $0x8] sm:$0xff]
        %v216 = vld [vmem:[%s2 + $0x10] sm:$0x3]
        %218 = vset.pattern.permute.xlu0 0
        %219 = vperm.xlu0 %218, %v214
        %v220 = vpop.permute.xlu0 %219
        %223 = vset.pattern.permute.xlu0 0
        %224 = vperm.xlu0 %223, %v215
        %v225 = vpop.permute.xlu0 %224
        %228 = vset.pattern.permute.xlu0 0
        %229 = vperm.xlu0 %228, %v216
        %v230 = vpop.permute.xlu0 %229
        %v235 = vunpack.c.l.b16 %v211
        %v236 = vunpack.c.l.b16 %v212
        %v237 = vunpack.c.l.b16 %v213
        %v238 = vpack.c.b16 %v236, %v235
        %v239 = vpack.c.b16 %v237, %v237
        %v256 = vunpack.c.l.b16 %v195
        %v257 = vunpack.c.l.b16 %v196
        %v258 = vunpack.c.l.b16 %v197
        %v259 = vunpack.c.l.b16 %v198
        %v260 = vunpack.c.l.b16 %v199
        %v261 = vunpack.c.l.b16 %v200
        %v262 = vunpack.c.l.b16 %v201
        %v263 = vunpack.c.l.b16 %v202
        %v264 = vunpack.c.l.b16 %v203
        %v265 = vunpack.c.l.b16 %v204
        %v266 = vunpack.c.l.b16 %v205
        %v267 = vunpack.c.l.b16 %v206
        %v268 = vunpack.c.l.b16 %v207
        %v269 = vunpack.c.l.b16 %v208
        %v270 = vunpack.c.l.b16 %v209
        %v271 = vunpack.c.l.b16 %v210
        %v272 = vpack.c.b16 %v257, %v256
        %v273 = vpack.c.b16 %v259, %v258
        %v274 = vpack.c.b16 %v261, %v260
        %v275 = vpack.c.b16 %v263, %v262
        %v276 = vpack.c.b16 %v265, %v264
        %v277 = vpack.c.b16 %v267, %v266
        %v278 = vpack.c.b16 %v269, %v268
        %v279 = vpack.c.b16 %v271, %v270
        %vm280 = vcmask 261120
        %v282 = vsel %vm280, %v238, 0
        %v285 = vsel %vm280, %v239, 0
        %v288 = vsel %vm280, %v272, 0
        %v291 = vsel %vm280, %v273, 0
        %v294 = vsel %vm280, %v274, 0
        %v297 = vsel %vm280, %v275, 0
        %v300 = vsel %vm280, %v276, 0
        %v303 = vsel %vm280, %v277, 0
        %v306 = vsel %vm280, %v278, 0
        %v309 = vsel %vm280, %v279, 0
        %311 = vmatpush.bf16.xpose.msra.mxu0 %v309
        %312 = vmatpush.bf16.xpose.msra.mxu0 %v306
        %313 = vmatpush.bf16.xpose.msra.mxu0 %v303
        %314 = vmatpush.bf16.xpose.msra.mxu0 %v300
        %315 = vmatpush.bf16.xpose.msra.mxu0 %v297
        %316 = vmatpush.bf16.xpose.msra.mxu0 %v294
        %317 = vmatpush.bf16.xpose.msra.mxu0 %v291
        %318 = vmatpush.bf16.xpose.msra.mxu0 %v288
        %319 = vmatmul.bf16.gmra.mxu0 %v282
        %v320 = vpop.f32.mrf.mxu0
        %v321 = vadd.f32 %v220, %v320
        %v322 = vpop.f32.mrf.mxu0
        %v323 = vadd.f32 %v225, %v322
        %324 = vmatmul.bf16.gmra.mxu0 %v285
        %v325 = vpop.f32.mrf.mxu0
        %v326 = vadd.f32 %v230, %v325
        %v327 = vpop.f32.mrf.mxu0
        %328 = vdwg.mxu0
        %329 = vst [vmem:[%s184] sm:$0xff] %v321
        %330 = vst [vmem:[%s184 + $0x8] sm:$0xff] %v323
        %331 = vst [vmem:[%s184 + $0x10] sm:$0x3] %v326
        %s332 = sand.u32 %s106, 1
        %s333 = sand.u32 %s106, 1
        %s334 = smul.addr %s333, 24
        %s335 = scalar_lea.vmem [#allocation2], %s334
        // Predicated region
        $region33: #{tpu_custom_call.1} parent=31 // pred_check
          %p336 = pneg %p116
        $region34: #{tpu_custom_call.1} parent=31 // pred_check_branch
          %338 = sbr.rel (%p336) target = $region36
        $region35: #{tpu_custom_call.1} parent=31 // pred_region
          %s339 = smul.addr %s18, 6
          %s340 = sadd.s32 %s19, %s339
          %s341 = smul.addr %s340, 8
          %s342 = scalar_lea.vmem %s3, %s341
          // Predicated region
          $region37: #{tpu_custom_call.1} parent=35 // pred_check
            _
          $region38: #{tpu_custom_call.1} parent=35 // pred_check_branch
            %344 = sbr.rel (0) target = $region40
          $region39: #{tpu_custom_call.1} parent=35 // pred_region
            // Predicated region
            $region41: #{tpu_custom_call.1} parent=39 // pred_check
              _
            $region42: #{tpu_custom_call.1} parent=39 // pred_check_branch
              %346 = sbr.rel (0) target = $region44
            $region43: #{tpu_custom_call.1} parent=39 // pred_region
              // Predicated region
              $region56: #{tpu_custom_call.1} parent=43 // pred_check
                _
              $region57: #{tpu_custom_call.1} parent=43 // pred_check_branch
                %366 = sbr.rel (0) target = $region59
              $region58: #{tpu_custom_call.1} parent=43 // pred_region
                loop: start=0, step=1, limit=1
                $region60: #{tpu_custom_call.1} parent=58 // loop_pre_header
                  _
                $region61: #{tpu_custom_call.1} parent=58 // loop_header
                  %s368 = sphi 0, %s372
                  %p369 = scmp.ge.s32.totalorder %s368, 1
                  %s373 = sphi %s335, %s335
                  %s374 = sphi %s342, %s342
                $region62: #{tpu_custom_call.1} parent=58 // loop_header_branch
                  %371 = sbr.rel (%p369) target = $region66
                $region63: #{tpu_custom_call.1} parent=58 // loop_body
                  %v375 = vld [vmem:[%s373] sm:$0xff]
                  %376 = vst [vmem:[%s374] sm:$0xff] %v375
                  %v377 = vld [vmem:[%s373 + $0x8] sm:$0xff]
                  %378 = vst [vmem:[%s374 + $0x10] sm:$0xff] %v377
                  %v379 = vld [vmem:[%s373 + $0x10] sm:$0xff]
                  %380 = vst [vmem:[%s374 + $0x20] sm:$0xff] %v379
                $region64: #{tpu_custom_call.1} parent=58 // loop_footer
                  %s372 = sadd.s32 1, %s368
                $region65: #{tpu_custom_call.1} parent=58 // loop_footer_branch
                  %367 = sbr.rel target = $region61
                $region66: #{tpu_custom_call.1} parent=58 // loop_exit
                  _
              $region59: #{tpu_custom_call.1} parent=43 // pred_fallthru
                _
              // Predicated region
              $region67: #{tpu_custom_call.1} parent=43 // pred_check
                _
              $region68: #{tpu_custom_call.1} parent=43 // pred_check_branch
                %382 = sbr.rel target = $region70
              $region69: #{tpu_custom_call.1} parent=43 // pred_region
                _
              $region70: #{tpu_custom_call.1} parent=43 // pred_fallthru
                _
            $region44: #{tpu_custom_call.1} parent=39 // pred_fallthru
              _
            // Predicated region
            $region45: #{tpu_custom_call.1} parent=39 // pred_check
              _
            $region46: #{tpu_custom_call.1} parent=39 // pred_check_branch
              %348 = sbr.rel target = $region48
            $region47: #{tpu_custom_call.1} parent=39 // pred_region
              %s350 = ssub.s32 256, 1
              loop: start=0, step=1, limit=1
              $region49: #{tpu_custom_call.1} parent=47 // loop_pre_header
                _
              $region50: #{tpu_custom_call.1} parent=47 // loop_header
                %s352 = sphi 0, %s356
                %p353 = scmp.ge.s32.totalorder %s352, 1
                %s357 = sphi %s335, %s335
                %s358 = sphi %s342, %s342
              $region51: #{tpu_custom_call.1} parent=47 // loop_header_branch
                %355 = sbr.rel (%p353) target = $region55
              $region52: #{tpu_custom_call.1} parent=47 // loop_body
                %v359 = vld [vmem:[%s357] sm:%s350]
                %360 = vst [vmem:[%s358] sm:%s350] %v359
                %v361 = vld [vmem:[%s357 + $0x8] sm:%s350]
                %362 = vst [vmem:[%s358 + $0x10] sm:%s350] %v361
                %v363 = vld [vmem:[%s357 + $0x10] sm:%s350]
                %364 = vst [vmem:[%s358 + $0x20] sm:%s350] %v363
              $region53: #{tpu_custom_call.1} parent=47 // loop_footer
                %s356 = sadd.s32 1, %s352
              $region54: #{tpu_custom_call.1} parent=47 // loop_footer_branch
                %351 = sbr.rel target = $region50
              $region55: #{tpu_custom_call.1} parent=47 // loop_exit
                _
            $region48: #{tpu_custom_call.1} parent=39 // pred_fallthru
              _
          $region40: #{tpu_custom_call.1} parent=35 // pred_fallthru
            _
          %383 = vnop
        $region36: #{tpu_custom_call.1} parent=31 // pred_fallthru
          _
      $region32: #{tpu_custom_call.1} parent=5 // pred_fallthru
        _
      %p384 = scmp.le.s32.totalorder 2, %s9
      // Predicated region
      $region71: #{tpu_custom_call.1} parent=5 // pred_check
        %p385 = pneg %p384
      $region72: #{tpu_custom_call.1} parent=5 // pred_check_branch
        %387 = sbr.rel (%p385) target = $region74
      $region73: #{tpu_custom_call.1} parent=5 // pred_region
        %s388 = ssub.s32 %s9, 2
        // Predicated region
        $region75: #{tpu_custom_call.1} parent=73 // pred_check
          %p389 = pneg %p122
        $region76: #{tpu_custom_call.1} parent=73 // pred_check_branch
          %391 = sbr.rel (%p389) target = $region78
        $region77: #{tpu_custom_call.1} parent=73 // pred_region
          %s392 = sand.u32 %s107, 1
          %s393 = sand.u32 %s107, 1
          %s394 = smul.addr %s393, 24
          %s395 = scalar_lea.vmem [#allocation2], %s394
        $region78: #{tpu_custom_call.1} parent=73 // pred_fallthru
          _
      $region74: #{tpu_custom_call.1} parent=5 // pred_fallthru
        _
    $region6: #{tpu_custom_call.1} parent=1 // loop_footer
      %s13 = sadd.s32 1, %s9
    $region7: #{tpu_custom_call.1} parent=1 // loop_footer_branch
      %8 = sbr.rel target = $region3
    $region8: #{tpu_custom_call.1} parent=1 // loop_exit
      _

</llo_original>
